<compile_context>
chip_gen: v6e
topology: v6e:2x2x1
jax: 0.10.0
libtpu: 0.0.40
codegen_flags: <defaults>
</compile_context>

<pallas_src>
import functools

import jax
import jax.numpy as jnp
from jax.experimental import pallas as pl
from jax.experimental.pallas import tpu as pltpu


# ---------------------------------------------------------------------------
# Fused GRU-stack Pallas kernel
# ---------------------------------------------------------------------------
def gru_stack(x2, hidden, folded_flat, num_layers):
    """Run all GRU layers in one pallas_call.

    x2          : (B, input_size)
    hidden      : (num_layers, B, H)  layer-major
    folded_flat : tuple of per-layer (wx, wh, b_comb, bh_n), flattened
    returns new hidden (num_layers, B, H)
    """
    L = num_layers
    B = x2.shape[0]
    H = hidden.shape[-1]

    def kernel(*refs):
        # refs = (x, hidden, wx_0, wh_0, b_0, bhn_0, ..., wx_{L-1}, ..., out)
        x_ref, h_ref = refs[0], refs[1]
        out_ref = refs[-1]
        layer_refs = refs[2:-1]

        inp = x_ref[...]                                  # (B, in_dim)
        for l in range(L):                                # static unroll (L small)
            wx_ref, wh_ref, b_ref, bhn_ref = layer_refs[4 * l:4 * l + 4]
            h = h_ref[l]                                  # (B, H)

            # Two lane-dense (., 3H) matmuls instead of six (., H) ones.
            gx = jnp.dot(inp, wx_ref[...],
                         preferred_element_type=jnp.float32) + b_ref[...]
            gh = jnp.dot(h, wh_ref[...],
                         preferred_element_type=jnp.float32)

            # r / i gates: bias already folded (bx+bh) into b_ref[:, :2H].
            ri = jax.nn.sigmoid(gx[:, :2 * H] + gh[:, :2 * H])
            r = ri[:, :H]
            z = ri[:, H:]

            # n gate: gx_n already has bx_n; bh_n is gated by resetgate.
            n = jnp.tanh(gx[:, 2 * H:] + r * (gh[:, 2 * H:] + bhn_ref[...]))

            hy = n + z * (h - n)
            out_ref[l] = hy.astype(out_ref.dtype)
            # TODO(synk): reference applies F.dropout(training=True) to each
            # layer output; stochastic dropout is not implemented (p = 0.0).
            inp = hy

    n_in = 2 + 4 * L
    vmem_spec = pl.BlockSpec(memory_space=pltpu.MemorySpace.VMEM)

    return pl.pallas_call(
        kernel,
        out_shape=jax.ShapeDtypeStruct((L, B, H), jnp.float32),
        in_specs=[vmem_spec] * n_in,
        out_specs=vmem_spec,
        input_output_aliases={1: 0},   # hidden (input #1) aliased to output
    )(x2, hidden, *folded_flat)


@functools.partial(jax.jit, static_argnums=(3,))
def gru_forward(x, hidden, folded_flat, num_layers):
    """GRU.forward.

    x      : (B, 1, input_size)       (seq-len 1, as in the PyTorch module)
    hidden : (num_layers, B, H)       layer-major
    returns (last-layer hidden as (B, 1, H), updated hidden)
    """
    x2 = jnp.squeeze(x, axis=1)
    new_hidden = gru_stack(x2, hidden, folded_flat, num_layers)
    return new_hidden[-1][:, None, :], new_hidden


# ---------------------------------------------------------------------------
# Parameters
# ---------------------------------------------------------------------------
def init_gru_params(key, input_size, hidden_size, num_layers):
    """Uniform(-std, std) init, std = 1/sqrt(hidden_size). Gate order: r, i, n."""
    std = 1.0 / float(hidden_size) ** 0.5
    params = []
    in_dims = [input_size] + [hidden_size] * (num_layers - 1)
    for l in range(num_layers):
        key, k1, k2, k3, k4 = jax.random.split(key, 5)
        wx = jax.random.uniform(k1, (in_dims[l], 3 * hidden_size), jnp.float32, -std, std)
        wh = jax.random.uniform(k2, (hidden_size, 3 * hidden_size), jnp.float32, -std, std)
        bx = jax.random.uniform(k3, (3 * hidden_size,), jnp.float32, -std, std)
        bh = jax.random.uniform(k4, (3 * hidden_size,), jnp.float32, -std, std)
        params.append((wx, wh, bx, bh))
    return params


def fold_params(raw_params):
    """Fold biases for the kernel: b_comb = [bx_ri + bh_ri, bx_n], bh_n separate."""
    folded = []
    for wx, wh, bx, bh in raw_params:
        H = wh.shape[0]
        b_comb = jnp.concatenate([bx[:2 * H] + bh[:2 * H], bx[2 * H:]]).reshape(1, 3 * H)
        bh_n = bh[2 * H:].reshape(1, H)
        folded += [wx, wh, b_comb, bh_n]
    return tuple(folded)


# ---------------------------------------------------------------------------
# Pure-JAX reference (uses the raw, unfolded parameters)
# ---------------------------------------------------------------------------
def reference_forward(x, hidden, raw_params):
    x2 = jnp.squeeze(x, axis=1)
    new_hidden = []
    inp = x2
    for l, (wx, wh, bx, bh) in enumerate(raw_params):
        H = wh.shape[0]
        h = hidden[l]
        gx = inp @ wx + bx
        gh = h @ wh + bh
        r = jax.nn.sigmoid(gx[:, :H] + gh[:, :H])
        z = jax.nn.sigmoid(gx[:, H:2 * H] + gh[:, H:2 * H])
        n = jnp.tanh(gx[:, 2 * H:] + r * gh[:, 2 * H:])
        hy = n + z * (h - n)
        new_hidden.append(hy)
        inp = hy
    new_hidden = jnp.stack(new_hidden, axis=0)
    return new_hidden[-1][:, None, :], new_hidden


# ---------------------------------------------------------------------------
if __name__ == "__main__":
    B, INPUT_SIZE, HIDDEN_SIZE, NUM_LAYERS = 8, 48, 32, 3

    key = jax.random.PRNGKey(0)
    k_x, k_h, k_p = jax.random.split(key, 3)

    x = jax.random.normal(k_x, (B, 1, INPUT_SIZE), jnp.float32)
    hidden = jax.random.normal(k_h, (NUM_LAYERS, B, HIDDEN_SIZE), jnp.float32)

    raw_params = init_gru_params(k_p, INPUT_SIZE, HIDDEN_SIZE, NUM_LAYERS)
    folded_flat = fold_params(raw_params)

    out, new_hidden = gru_forward(x, hidden, folded_flat, NUM_LAYERS)
    out = jax.block_until_ready(out)
    new_hidden = jax.block_until_ready(new_hidden)

    ref_out, ref_hidden = reference_forward(x, hidden, raw_params)

    assert out.shape == (B, 1, HIDDEN_SIZE)
    assert new_hidden.shape == (NUM_LAYERS, B, HIDDEN_SIZE)
    assert jnp.allclose(out, ref_out, atol=1e-5, rtol=1e-5)
    assert jnp.allclose(new_hidden, ref_hidden, atol=1e-5, rtol=1e-5)

    print("KERNEL_OK")
</pallas_src>

<mosaic_0001>
module attributes {stable_mosaic.version = 11 : i64} {
  func.func @kernel(%arg0: memref<8x48xf32, #tpu.memory_space<vmem>>, %arg1: memref<3x8x32xf32, #tpu.memory_space<vmem>>, %arg2: memref<48x96xf32, #tpu.memory_space<vmem>>, %arg3: memref<32x96xf32, #tpu.memory_space<vmem>>, %arg4: memref<1x96xf32, #tpu.memory_space<vmem>>, %arg5: memref<1x32xf32, #tpu.memory_space<vmem>>, %arg6: memref<32x96xf32, #tpu.memory_space<vmem>>, %arg7: memref<32x96xf32, #tpu.memory_space<vmem>>, %arg8: memref<1x96xf32, #tpu.memory_space<vmem>>, %arg9: memref<1x32xf32, #tpu.memory_space<vmem>>, %arg10: memref<32x96xf32, #tpu.memory_space<vmem>>, %arg11: memref<32x96xf32, #tpu.memory_space<vmem>>, %arg12: memref<1x96xf32, #tpu.memory_space<vmem>>, %arg13: memref<1x32xf32, #tpu.memory_space<vmem>>, %arg14: memref<3x8x32xf32, #tpu.memory_space<vmem>>) attributes {dimension_semantics = [], scalar_prefetch = 0 : i64, scratch_operands = 0 : i64, tpu.core_type = #tpu.core_type<tc>} {
    %c0 = arith.constant 0 : index
    %c0_0 = arith.constant 0 : index
    %0 = vector.load %arg0[%c0, %c0_0] : memref<8x48xf32, #tpu.memory_space<vmem>>, vector<8x48xf32>
    %c0_1 = arith.constant 0 : index
    %c0_2 = arith.constant 0 : index
    %c0_3 = arith.constant 0 : index
    %1 = vector.load %arg1[%c0_1, %c0_2, %c0_3] : memref<3x8x32xf32, #tpu.memory_space<vmem>>, vector<1x8x32xf32>
    %2 = vector.shape_cast %1 : vector<1x8x32xf32> to vector<8x32xf32>
    %c0_4 = arith.constant 0 : index
    %c0_5 = arith.constant 0 : index
    %3 = vector.load %arg2[%c0_4, %c0_5] : memref<48x96xf32, #tpu.memory_space<vmem>>, vector<48x96xf32>
    %cst = arith.constant dense<0.000000e+00> : vector<8x96xf32>
    %4 = tpu.matmul %0, %3, %cst {dimension_numbers = #tpu.dot_dimension_numbers<[1], [0], [0], [1], [0, 0, 1, 1], [], []>} : vector<8x48xf32>, vector<48x96xf32>, vector<8x96xf32> -> vector<8x96xf32>
    %c0_6 = arith.constant 0 : index
    %c0_7 = arith.constant 0 : index
    %5 = vector.load %arg4[%c0_6, %c0_7] : memref<1x96xf32, #tpu.memory_space<vmem>>, vector<1x96xf32>
    %6 = vector.broadcast %5 : vector<1x96xf32> to vector<8x96xf32>
    %7 = arith.addf %4, %6 : vector<8x96xf32>
    %c0_8 = arith.constant 0 : index
    %c0_9 = arith.constant 0 : index
    %8 = vector.load %arg3[%c0_8, %c0_9] : memref<32x96xf32, #tpu.memory_space<vmem>>, vector<32x96xf32>
    %cst_10 = arith.constant dense<0.000000e+00> : vector<8x96xf32>
    %9 = tpu.matmul %2, %8, %cst_10 {dimension_numbers = #tpu.dot_dimension_numbers<[1], [0], [0], [1], [0, 0, 1, 1], [], []>} : vector<8x32xf32>, vector<32x96xf32>, vector<8x96xf32> -> vector<8x96xf32>
    %10 = vector.extract_strided_slice %7 {offsets = [0, 0], sizes = [8, 64], strides = [1, 1]} : vector<8x96xf32> to vector<8x64xf32>
    %11 = vector.extract_strided_slice %9 {offsets = [0, 0], sizes = [8, 64], strides = [1, 1]} : vector<8x96xf32> to vector<8x64xf32>
    %12 = arith.addf %10, %11 : vector<8x64xf32>
    %13 = arith.negf %12 : vector<8x64xf32>
    %14 = math.exp %13 : vector<8x64xf32>
    %cst_11 = arith.constant 1.000000e+00 : f32
    %15 = vector.broadcast %cst_11 : f32 to vector<8x64xf32>
    %16 = arith.addf %15, %14 : vector<8x64xf32>
    %17 = arith.divf %15, %16 : vector<8x64xf32>
    %18 = vector.extract_strided_slice %17 {offsets = [0, 0], sizes = [8, 32], strides = [1, 1]} : vector<8x64xf32> to vector<8x32xf32>
    %19 = vector.extract_strided_slice %17 {offsets = [0, 32], sizes = [8, 32], strides = [1, 1]} : vector<8x64xf32> to vector<8x32xf32>
    %20 = vector.extract_strided_slice %7 {offsets = [0, 64], sizes = [8, 32], strides = [1, 1]} : vector<8x96xf32> to vector<8x32xf32>
    %21 = vector.extract_strided_slice %9 {offsets = [0, 64], sizes = [8, 32], strides = [1, 1]} : vector<8x96xf32> to vector<8x32xf32>
    %c0_12 = arith.constant 0 : index
    %c0_13 = arith.constant 0 : index
    %22 = vector.load %arg5[%c0_12, %c0_13] : memref<1x32xf32, #tpu.memory_space<vmem>>, vector<1x32xf32>
    %23 = vector.broadcast %22 : vector<1x32xf32> to vector<8x32xf32>
    %24 = arith.addf %21, %23 : vector<8x32xf32>
    %25 = arith.mulf %18, %24 : vector<8x32xf32>
    %26 = arith.addf %20, %25 : vector<8x32xf32>
    %27 = math.tanh %26 : vector<8x32xf32>
    %28 = arith.subf %2, %27 : vector<8x32xf32>
    %29 = arith.mulf %19, %28 : vector<8x32xf32>
    %30 = arith.addf %27, %29 : vector<8x32xf32>
    %c0_14 = arith.constant 0 : index
    %c0_15 = arith.constant 0 : index
    %c0_16 = arith.constant 0 : index
    %31 = vector.load %arg14[%c0_14, %c0_15, %c0_16] : memref<3x8x32xf32, #tpu.memory_space<vmem>>, vector<1x8x32xf32>
    %32 = vector.shape_cast %31 : vector<1x8x32xf32> to vector<8x32xf32>
    %33 = vector.shape_cast %30 : vector<8x32xf32> to vector<1x8x32xf32>
    tpu.vector_store %arg14[%c0_14, %c0_15, %c0_16], %33 {strides = array<i32>} : memref<3x8x32xf32, #tpu.memory_space<vmem>>, vector<1x8x32xf32>,
    %c1 = arith.constant 1 : index
    %c0_17 = arith.constant 0 : index
    %c0_18 = arith.constant 0 : index
    %34 = vector.load %arg1[%c1, %c0_17, %c0_18] : memref<3x8x32xf32, #tpu.memory_space<vmem>>, vector<1x8x32xf32>
    %35 = vector.shape_cast %34 : vector<1x8x32xf32> to vector<8x32xf32>
    %c0_19 = arith.constant 0 : index
    %c0_20 = arith.constant 0 : index
    %36 = vector.load %arg6[%c0_19, %c0_20] : memref<32x96xf32, #tpu.memory_space<vmem>>, vector<32x96xf32>
    %cst_21 = arith.constant dense<0.000000e+00> : vector<8x96xf32>
    %37 = tpu.matmul %30, %36, %cst_21 {dimension_numbers = #tpu.dot_dimension_numbers<[1], [0], [0], [1], [0, 0, 1, 1], [], []>} : vector<8x32xf32>, vector<32x96xf32>, vector<8x96xf32> -> vector<8x96xf32>
    %c0_22 = arith.constant 0 : index
    %c0_23 = arith.constant 0 : index
    %38 = vector.load %arg8[%c0_22, %c0_23] : memref<1x96xf32, #tpu.memory_space<vmem>>, vector<1x96xf32>
    %39 = vector.broadcast %38 : vector<1x96xf32> to vector<8x96xf32>
    %40 = arith.addf %37, %39 : vector<8x96xf32>
    %c0_24 = arith.constant 0 : index
    %c0_25 = arith.constant 0 : index
    %41 = vector.load %arg7[%c0_24, %c0_25] : memref<32x96xf32, #tpu.memory_space<vmem>>, vector<32x96xf32>
    %cst_26 = arith.constant dense<0.000000e+00> : vector<8x96xf32>
    %42 = tpu.matmul %35, %41, %cst_26 {dimension_numbers = #tpu.dot_dimension_numbers<[1], [0], [0], [1], [0, 0, 1, 1], [], []>} : vector<8x32xf32>, vector<32x96xf32>, vector<8x96xf32> -> vector<8x96xf32>
    %43 = vector.extract_strided_slice %40 {offsets = [0, 0], sizes = [8, 64], strides = [1, 1]} : vector<8x96xf32> to vector<8x64xf32>
    %44 = vector.extract_strided_slice %42 {offsets = [0, 0], sizes = [8, 64], strides = [1, 1]} : vector<8x96xf32> to vector<8x64xf32>
    %45 = arith.addf %43, %44 : vector<8x64xf32>
    %46 = arith.negf %45 : vector<8x64xf32>
    %47 = math.exp %46 : vector<8x64xf32>
    %cst_27 = arith.constant 1.000000e+00 : f32
    %48 = vector.broadcast %cst_27 : f32 to vector<8x64xf32>
    %49 = arith.addf %48, %47 : vector<8x64xf32>
    %50 = arith.divf %48, %49 : vector<8x64xf32>
    %51 = vector.extract_strided_slice %50 {offsets = [0, 0], sizes = [8, 32], strides = [1, 1]} : vector<8x64xf32> to vector<8x32xf32>
    %52 = vector.extract_strided_slice %50 {offsets = [0, 32], sizes = [8, 32], strides = [1, 1]} : vector<8x64xf32> to vector<8x32xf32>
    %53 = vector.extract_strided_slice %40 {offsets = [0, 64], sizes = [8, 32], strides = [1, 1]} : vector<8x96xf32> to vector<8x32xf32>
    %54 = vector.extract_strided_slice %42 {offsets = [0, 64], sizes = [8, 32], strides = [1, 1]} : vector<8x96xf32> to vector<8x32xf32>
    %c0_28 = arith.constant 0 : index
    %c0_29 = arith.constant 0 : index
    %55 = vector.load %arg9[%c0_28, %c0_29] : memref<1x32xf32, #tpu.memory_space<vmem>>, vector<1x32xf32>
    %56 = vector.broadcast %55 : vector<1x32xf32> to vector<8x32xf32>
    %57 = arith.addf %54, %56 : vector<8x32xf32>
    %58 = arith.mulf %51, %57 : vector<8x32xf32>
    %59 = arith.addf %53, %58 : vector<8x32xf32>
    %60 = math.tanh %59 : vector<8x32xf32>
    %61 = arith.subf %35, %60 : vector<8x32xf32>
    %62 = arith.mulf %52, %61 : vector<8x32xf32>
    %63 = arith.addf %60, %62 : vector<8x32xf32>
    %c1_30 = arith.constant 1 : index
    %c0_31 = arith.constant 0 : index
    %c0_32 = arith.constant 0 : index
    %64 = vector.load %arg14[%c1_30, %c0_31, %c0_32] : memref<3x8x32xf32, #tpu.memory_space<vmem>>, vector<1x8x32xf32>
    %65 = vector.shape_cast %64 : vector<1x8x32xf32> to vector<8x32xf32>
    %66 = vector.shape_cast %63 : vector<8x32xf32> to vector<1x8x32xf32>
    tpu.vector_store %arg14[%c1_30, %c0_31, %c0_32], %66 {strides = array<i32>} : memref<3x8x32xf32, #tpu.memory_space<vmem>>, vector<1x8x32xf32>,
    %c2 = arith.constant 2 : index
    %c0_33 = arith.constant 0 : index
    %c0_34 = arith.constant 0 : index
    %67 = vector.load %arg1[%c2, %c0_33, %c0_34] : memref<3x8x32xf32, #tpu.memory_space<vmem>>, vector<1x8x32xf32>
    %68 = vector.shape_cast %67 : vector<1x8x32xf32> to vector<8x32xf32>
    %c0_35 = arith.constant 0 : index
    %c0_36 = arith.constant 0 : index
    %69 = vector.load %arg10[%c0_35, %c0_36] : memref<32x96xf32, #tpu.memory_space<vmem>>, vector<32x96xf32>
    %cst_37 = arith.constant dense<0.000000e+00> : vector<8x96xf32>
    %70 = tpu.matmul %63, %69, %cst_37 {dimension_numbers = #tpu.dot_dimension_numbers<[1], [0], [0], [1], [0, 0, 1, 1], [], []>} : vector<8x32xf32>, vector<32x96xf32>, vector<8x96xf32> -> vector<8x96xf32>
    %c0_38 = arith.constant 0 : index
    %c0_39 = arith.constant 0 : index
    %71 = vector.load %arg12[%c0_38, %c0_39] : memref<1x96xf32, #tpu.memory_space<vmem>>, vector<1x96xf32>
    %72 = vector.broadcast %71 : vector<1x96xf32> to vector<8x96xf32>
    %73 = arith.addf %70, %72 : vector<8x96xf32>
    %c0_40 = arith.constant 0 : index
    %c0_41 = arith.constant 0 : index
    %74 = vector.load %arg11[%c0_40, %c0_41] : memref<32x96xf32, #tpu.memory_space<vmem>>, vector<32x96xf32>
    %cst_42 = arith.constant dense<0.000000e+00> : vector<8x96xf32>
    %75 = tpu.matmul %68, %74, %cst_42 {dimension_numbers = #tpu.dot_dimension_numbers<[1], [0], [0], [1], [0, 0, 1, 1], [], []>} : vector<8x32xf32>, vector<32x96xf32>, vector<8x96xf32> -> vector<8x96xf32>
    %76 = vector.extract_strided_slice %73 {offsets = [0, 0], sizes = [8, 64], strides = [1, 1]} : vector<8x96xf32> to vector<8x64xf32>
    %77 = vector.extract_strided_slice %75 {offsets = [0, 0], sizes = [8, 64], strides = [1, 1]} : vector<8x96xf32> to vector<8x64xf32>
    %78 = arith.addf %76, %77 : vector<8x64xf32>
    %79 = arith.negf %78 : vector<8x64xf32>
    %80 = math.exp %79 : vector<8x64xf32>
    %cst_43 = arith.constant 1.000000e+00 : f32
    %81 = vector.broadcast %cst_43 : f32 to vector<8x64xf32>
    %82 = arith.addf %81, %80 : vector<8x64xf32>
    %83 = arith.divf %81, %82 : vector<8x64xf32>
    %84 = vector.extract_strided_slice %83 {offsets = [0, 0], sizes = [8, 32], strides = [1, 1]} : vector<8x64xf32> to vector<8x32xf32>
    %85 = vector.extract_strided_slice %83 {offsets = [0, 32], sizes = [8, 32], strides = [1, 1]} : vector<8x64xf32> to vector<8x32xf32>
    %86 = vector.extract_strided_slice %73 {offsets = [0, 64], sizes = [8, 32], strides = [1, 1]} : vector<8x96xf32> to vector<8x32xf32>
    %87 = vector.extract_strided_slice %75 {offsets = [0, 64], sizes = [8, 32], strides = [1, 1]} : vector<8x96xf32> to vector<8x32xf32>
    %c0_44 = arith.constant 0 : index
    %c0_45 = arith.constant 0 : index
    %88 = vector.load %arg13[%c0_44, %c0_45] : memref<1x32xf32, #tpu.memory_space<vmem>>, vector<1x32xf32>
    %89 = vector.broadcast %88 : vector<1x32xf32> to vector<8x32xf32>
    %90 = arith.addf %87, %89 : vector<8x32xf32>
    %91 = arith.mulf %84, %90 : vector<8x32xf32>
    %92 = arith.addf %86, %91 : vector<8x32xf32>
    %93 = math.tanh %92 : vector<8x32xf32>
    %94 = arith.subf %68, %93 : vector<8x32xf32>
    %95 = arith.mulf %85, %94 : vector<8x32xf32>
    %96 = arith.addf %93, %95 : vector<8x32xf32>
    %c2_46 = arith.constant 2 : index
    %c0_47 = arith.constant 0 : index
    %c0_48 = arith.constant 0 : index
    %97 = vector.load %arg14[%c2_46, %c0_47, %c0_48] : memref<3x8x32xf32, #tpu.memory_space<vmem>>, vector<1x8x32xf32>
    %98 = vector.shape_cast %97 : vector<1x8x32xf32> to vector<8x32xf32>
    %99 = vector.shape_cast %96 : vector<8x32xf32> to vector<1x8x32xf32>
    tpu.vector_store %arg14[%c2_46, %c0_47, %c0_48], %99 {strides = array<i32>} : memref<3x8x32xf32, #tpu.memory_space<vmem>>, vector<1x8x32xf32>,
    return
  }
}

</mosaic_0001>

<llo_original>
// kernel: gru_forward.1
$region0: #{gru_forward.1}
  #allocation0 [shape = 'u32[]', space=smem, size = 0x4, offset = 0x4, fixed_abs, tag = 'smem constant byte address 0x4 - core index']
  #allocation1 [shape = 'u32[144,128]{1,0:T(1,128)}', space=vmem, size = 0x12000, scoped, tag = 'internal scratch']
  %s0 = inlined_call_operand.vmem [shape: f32[8,48], index: 0, kind: input, shape index: {}]
  %s1 = inlined_call_operand.vmem [shape: f32[3,8,32], index: 1, kind: input, shape index: {}, may-alias: {1,14}]
  %s2 = inlined_call_operand.hbm [shape: f32[48,96], index: 2, kind: input, shape index: {}]
  %s3 = inlined_call_operand.vmem [shape: f32[32,96], index: 3, kind: input, shape index: {}]
  %s4 = inlined_call_operand.vmem [shape: f32[1,96], index: 4, kind: input, shape index: {}]
  %s5 = inlined_call_operand.hbm [shape: f32[1,32], index: 5, kind: input, shape index: {}]
  %s6 = inlined_call_operand.hbm [shape: f32[32,96], index: 6, kind: input, shape index: {}]
  %s7 = inlined_call_operand.hbm [shape: f32[32,96], index: 7, kind: input, shape index: {}]
  %s8 = inlined_call_operand.hbm [shape: f32[1,96], index: 8, kind: input, shape index: {}]
  %s9 = inlined_call_operand.hbm [shape: f32[1,32], index: 9, kind: input, shape index: {}]
  %s10 = inlined_call_operand.hbm [shape: f32[32,96], index: 10, kind: input, shape index: {}]
  %s11 = inlined_call_operand.hbm [shape: f32[32,96], index: 11, kind: input, shape index: {}]
  %s12 = inlined_call_operand.hbm [shape: f32[1,96], index: 12, kind: input, shape index: {}]
  %s13 = inlined_call_operand.hbm [shape: f32[1,32], index: 13, kind: input, shape index: {}]
  %s14 = inlined_call_operand.vmem [shape: f32[3,8,32], index: 14, kind: output, shape index: {}, may-alias: {1,14}]
  %s15 = sld [smem:[#allocation0]]
  $region106: #{gru_forward.1} parent=0
    _
  %s17 = ssub.s32 1, %s15
  %s18 = scalar_select 0, %s17, %s15
  $region1: #{gru_forward.1} parent=0
    #allocation2 [shape = 'u8[24576]{0}', space=vmem, size = 0x6000, scoped, tag = 'input window, operand 2, single buffered']
    #allocation3 [shape = 's32[1]{0}', space=sflag, size = 0x4, scoped, tag = 'scoped memory for gru_forward.1']
    #allocation4 [shape = 'u8[512]{0}', space=vmem, size = 0x400, scoped, tag = 'input window, operand 5, single buffered']
    #allocation5 [shape = 's32[1]{0}', space=sflag, size = 0x4, scoped, tag = 'scoped memory for gru_forward.1']
    #allocation6 [shape = 'u8[16384]{0}', space=vmem, size = 0x4000, scoped, tag = 'input window, operand 6, single buffered']
    #allocation7 [shape = 'u8[16384]{0}', space=vmem, size = 0x4000, scoped, tag = 'input window, operand 7, single buffered']
    #allocation8 [shape = 's32[1]{0}', space=sflag, size = 0x4, scoped, tag = 'scoped memory for gru_forward.1']
    #allocation9 [shape = 'u8[512]{0}', space=vmem, size = 0x400, scoped, tag = 'input window, operand 8, single buffered']
    #allocation10 [shape = 'u8[512]{0}', space=vmem, size = 0x400, scoped, tag = 'input window, operand 9, single buffered']
    #allocation11 [shape = 's32[1]{0}', space=sflag, size = 0x4, scoped, tag = 'scoped memory for gru_forward.1']
    #allocation12 [shape = 'u8[16384]{0}', space=vmem, size = 0x4000, scoped, tag = 'input window, operand 10, single buffered']
    #allocation13 [shape = 'u8[16384]{0}', space=vmem, size = 0x4000, scoped, tag = 'input window, operand 11, single buffered']
    #allocation14 [shape = 's32[1]{0}', space=sflag, size = 0x4, scoped, tag = 'scoped memory for gru_forward.1']
    #allocation15 [shape = 'u8[512]{0}', space=vmem, size = 0x400, scoped, tag = 'input window, operand 12, single buffered']
    #allocation16 [shape = 'u8[512]{0}', space=vmem, size = 0x400, scoped, tag = 'input window, operand 13, single buffered']
    #allocation17 [shape = 's32[1]{0}', space=sflag, size = 0x4, scoped, tag = 'scoped memory for gru_forward.1']
    %19 = vsyncpa [#allocation3], 0
    %20 = vsyncpa [#allocation5], 0
    %21 = vsyncpa [#allocation8], 0
    %22 = vsyncpa [#allocation11], 0
    %23 = vsyncpa [#allocation14], 0
    %24 = vsyncpa [#allocation17], 0
    // Predicated region
    $region2: #{gru_forward.1} parent=1 // pred_check
      _
    $region3: #{gru_forward.1} parent=1 // pred_check_branch
      %26 = sbr.rel (0) target = $region5
    $region4: #{gru_forward.1} parent=1 // pred_region
      _
    $region5: #{gru_forward.1} parent=1 // pred_fallthru
      _
    // Predicated region
    $region6: #{gru_forward.1} parent=1 // pred_check
      _
    $region7: #{gru_forward.1} parent=1 // pred_check_branch
      %28 = sbr.rel (0) target = $region9
    $region8: #{gru_forward.1} parent=1 // pred_region
      _
    $region9: #{gru_forward.1} parent=1 // pred_fallthru
      _
    // Predicated region
    $region10: #{gru_forward.1} parent=1 // pred_check
      _
    $region11: #{gru_forward.1} parent=1 // pred_check_branch
      %30 = sbr.rel (0) target = $region13
    $region12: #{gru_forward.1} parent=1 // pred_region
      %s32 = ssub.s32 768, 768
      %33 = vsyncadd [#allocation3], %s32
      %s34 = sshll.u32 [#allocation2], 4
      %s35 = int_to_ptr.vmem [resolvable:$true] %s34
      %40 = dma.hbm_to_vmem [thread:$0]  %s2, 768, %s35, [#allocation3], 128, 128, 8
    $region13: #{gru_forward.1} parent=1 // pred_fallthru
      _
    // Predicated region
    $region14: #{gru_forward.1} parent=1 // pred_check
      _
    $region15: #{gru_forward.1} parent=1 // pred_check_branch
      %42 = sbr.rel (0) target = $region17
    $region16: #{gru_forward.1} parent=1 // pred_region
      _
    $region17: #{gru_forward.1} parent=1 // pred_fallthru
      _
    // Predicated region
    $region18: #{gru_forward.1} parent=1 // pred_check
      _
    $region19: #{gru_forward.1} parent=1 // pred_check_branch
      %44 = sbr.rel (0) target = $region21
    $region20: #{gru_forward.1} parent=1 // pred_region
      _
    $region21: #{gru_forward.1} parent=1 // pred_fallthru
      _
    // Predicated region
    $region22: #{gru_forward.1} parent=1 // pred_check
      _
    $region23: #{gru_forward.1} parent=1 // pred_check_branch
      %46 = sbr.rel (0) target = $region25
    $region24: #{gru_forward.1} parent=1 // pred_region
      %s48 = ssub.s32 16, 16
      %49 = vsyncadd [#allocation5], %s48
      %s51 = sshll.u32 [#allocation4], 4
      %s52 = int_to_ptr.vmem [resolvable:$true] %s51
      %54 = dma.hbm_to_vmem [thread:$0]  %s5, 16, %s52, [#allocation5]
    $region25: #{gru_forward.1} parent=1 // pred_fallthru
      _
    // Predicated region
    $region26: #{gru_forward.1} parent=1 // pred_check
      _
    $region27: #{gru_forward.1} parent=1 // pred_check_branch
      %56 = sbr.rel (0) target = $region29
    $region28: #{gru_forward.1} parent=1 // pred_region
      %s58 = ssub.s32 512, 512
      %59 = vsyncadd [#allocation5], %s58
      %s60 = sshll.u32 [#allocation6], 4
      %s61 = int_to_ptr.vmem [resolvable:$true] %s60
      %66 = dma.hbm_to_vmem [thread:$0]  %s6, 512, %s61, [#allocation5], 128, 128, 8
    $region29: #{gru_forward.1} parent=1 // pred_fallthru
      _
    // Predicated region
    $region30: #{gru_forward.1} parent=1 // pred_check
      _
    $region31: #{gru_forward.1} parent=1 // pred_check_branch
      %68 = sbr.rel (0) target = $region33
    $region32: #{gru_forward.1} parent=1 // pred_region
      %s70 = ssub.s32 512, 512
      %71 = vsyncadd [#allocation8], %s70
      %s72 = sshll.u32 [#allocation7], 4
      %s73 = int_to_ptr.vmem [resolvable:$true] %s72
      %78 = dma.hbm_to_vmem [thread:$0]  %s7, 512, %s73, [#allocation8], 128, 128, 8
    $region33: #{gru_forward.1} parent=1 // pred_fallthru
      _
    // Predicated region
    $region34: #{gru_forward.1} parent=1 // pred_check
      _
    $region35: #{gru_forward.1} parent=1 // pred_check_branch
      %80 = sbr.rel (0) target = $region37
    $region36: #{gru_forward.1} parent=1 // pred_region
      %s82 = ssub.s32 16, 16
      %83 = vsyncadd [#allocation8], %s82
      %s85 = sshll.u32 [#allocation9], 4
      %s86 = int_to_ptr.vmem [resolvable:$true] %s85
      %88 = dma.hbm_to_vmem [thread:$0]  %s8, 16, %s86, [#allocation8]
    $region37: #{gru_forward.1} parent=1 // pred_fallthru
      _
    // Predicated region
    $region38: #{gru_forward.1} parent=1 // pred_check
      _
    $region39: #{gru_forward.1} parent=1 // pred_check_branch
      %90 = sbr.rel (0) target = $region41
    $region40: #{gru_forward.1} parent=1 // pred_region
      %s92 = ssub.s32 16, 16
      %93 = vsyncadd [#allocation11], %s92
      %s95 = sshll.u32 [#allocation10], 4
      %s96 = int_to_ptr.vmem [resolvable:$true] %s95
      %98 = dma.hbm_to_vmem [thread:$0]  %s9, 16, %s96, [#allocation11]
    $region41: #{gru_forward.1} parent=1 // pred_fallthru
      _
    // Predicated region
    $region42: #{gru_forward.1} parent=1 // pred_check
      _
    $region43: #{gru_forward.1} parent=1 // pred_check_branch
      %100 = sbr.rel (0) target = $region45
    $region44: #{gru_forward.1} parent=1 // pred_region
      %s102 = ssub.s32 512, 512
      %103 = vsyncadd [#allocation11], %s102
      %s104 = sshll.u32 [#allocation12], 4
      %s105 = int_to_ptr.vmem [resolvable:$true] %s104
      %110 = dma.hbm_to_vmem [thread:$0]  %s10, 512, %s105, [#allocation11], 128, 128, 8
    $region45: #{gru_forward.1} parent=1 // pred_fallthru
      _
    // Predicated region
    $region46: #{gru_forward.1} parent=1 // pred_check
      _
    $region47: #{gru_forward.1} parent=1 // pred_check_branch
      %112 = sbr.rel (0) target = $region49
    $region48: #{gru_forward.1} parent=1 // pred_region
      %s114 = ssub.s32 512, 512
      %115 = vsyncadd [#allocation14], %s114
      %s116 = sshll.u32 [#allocation13], 4
      %s117 = int_to_ptr.vmem [resolvable:$true] %s116
      %122 = dma.hbm_to_vmem [thread:$0]  %s11, 512, %s117, [#allocation14], 128, 128, 8
    $region49: #{gru_forward.1} parent=1 // pred_fallthru
      _
    // Predicated region
    $region50: #{gru_forward.1} parent=1 // pred_check
      _
    $region51: #{gru_forward.1} parent=1 // pred_check_branch
      %124 = sbr.rel (0) target = $region53
    $region52: #{gru_forward.1} parent=1 // pred_region
      %s126 = ssub.s32 16, 16
      %127 = vsyncadd [#allocation14], %s126
      %s129 = sshll.u32 [#allocation15], 4
      %s130 = int_to_ptr.vmem [resolvable:$true] %s129
      %132 = dma.hbm_to_vmem [thread:$0]  %s12, 16, %s130, [#allocation14]
    $region53: #{gru_forward.1} parent=1 // pred_fallthru
      _
    // Predicated region
    $region54: #{gru_forward.1} parent=1 // pred_check
      _
    $region55: #{gru_forward.1} parent=1 // pred_check_branch
      %134 = sbr.rel (0) target = $region57
    $region56: #{gru_forward.1} parent=1 // pred_region
      %s136 = ssub.s32 16, 16
      %137 = vsyncadd [#allocation17], %s136
      %s139 = sshll.u32 [#allocation16], 4
      %s140 = int_to_ptr.vmem [resolvable:$true] %s139
      %142 = dma.hbm_to_vmem [thread:$0]  %s13, 16, %s140, [#allocation17]
    $region57: #{gru_forward.1} parent=1 // pred_fallthru
      _
    // Predicated region
    $region58: #{gru_forward.1} parent=1 // pred_check
      _
    $region59: #{gru_forward.1} parent=1 // pred_check_branch
      %144 = sbr.rel (0) target = $region61
    $region60: #{gru_forward.1} parent=1 // pred_region
      %145 = dma.done [#allocation3], 768
    $region61: #{gru_forward.1} parent=1 // pred_fallthru
      _
    // Predicated region
    $region62: #{gru_forward.1} parent=1 // pred_check
      _
    $region63: #{gru_forward.1} parent=1 // pred_check_branch
      %147 = sbr.rel (0) target = $region65
    $region64: #{gru_forward.1} parent=1 // pred_region
      %148 = dma.done [#allocation5], 16
    $region65: #{gru_forward.1} parent=1 // pred_fallthru
      _
    // Predicated region
    $region66: #{gru_forward.1} parent=1 // pred_check
      _
    $region67: #{gru_forward.1} parent=1 // pred_check_branch
      %150 = sbr.rel (0) target = $region69
    $region68: #{gru_forward.1} parent=1 // pred_region
      %151 = dma.done [#allocation5], 512
    $region69: #{gru_forward.1} parent=1 // pred_fallthru
      _
    // Predicated region
    $region70: #{gru_forward.1} parent=1 // pred_check
      _
    $region71: #{gru_forward.1} parent=1 // pred_check_branch
      %153 = sbr.rel (0) target = $region73
    $region72: #{gru_forward.1} parent=1 // pred_region
      %154 = dma.done [#allocation8], 512
    $region73: #{gru_forward.1} parent=1 // pred_fallthru
      _
    // Predicated region
    $region74: #{gru_forward.1} parent=1 // pred_check
      _
    $region75: #{gru_forward.1} parent=1 // pred_check_branch
      %156 = sbr.rel (0) target = $region77
    $region76: #{gru_forward.1} parent=1 // pred_region
      %157 = dma.done [#allocation8], 16
    $region77: #{gru_forward.1} parent=1 // pred_fallthru
      _
    // Predicated region
    $region78: #{gru_forward.1} parent=1 // pred_check
      _
    $region79: #{gru_forward.1} parent=1 // pred_check_branch
      %159 = sbr.rel (0) target = $region81
    $region80: #{gru_forward.1} parent=1 // pred_region
      %160 = dma.done [#allocation11], 16
    $region81: #{gru_forward.1} parent=1 // pred_fallthru
      _
    // Predicated region
    $region82: #{gru_forward.1} parent=1 // pred_check
      _
    $region83: #{gru_forward.1} parent=1 // pred_check_branch
      %162 = sbr.rel (0) target = $region85
    $region84: #{gru_forward.1} parent=1 // pred_region
      %163 = dma.done [#allocation11], 512
    $region85: #{gru_forward.1} parent=1 // pred_fallthru
      _
    // Predicated region
    $region86: #{gru_forward.1} parent=1 // pred_check
      _
    $region87: #{gru_forward.1} parent=1 // pred_check_branch
      %165 = sbr.rel (0) target = $region89
    $region88: #{gru_forward.1} parent=1 // pred_region
      %166 = dma.done [#allocation14], 512
    $region89: #{gru_forward.1} parent=1 // pred_fallthru
      _
    // Predicated region
    $region90: #{gru_forward.1} parent=1 // pred_check
      _
    $region91: #{gru_forward.1} parent=1 // pred_check_branch
      %168 = sbr.rel (0) target = $region93
    $region92: #{gru_forward.1} parent=1 // pred_region
      %169 = dma.done [#allocation14], 16
    $region93: #{gru_forward.1} parent=1 // pred_fallthru
      _
    // Predicated region
    $region94: #{gru_forward.1} parent=1 // pred_check
      _
    $region95: #{gru_forward.1} parent=1 // pred_check_branch
      %171 = sbr.rel (0) target = $region97
    $region96: #{gru_forward.1} parent=1 // pred_region
      %172 = dma.done [#allocation17], 16
    $region97: #{gru_forward.1} parent=1 // pred_fallthru
      _
    %v173 = vld [vmem:[%s0] sm:$0xff]
    %v174 = vld [vmem:[%s1] sm:$0xff]
    %v175 = vld [vmem:[#allocation2] sm:$0xff]
    %v176 = vld [vmem:[#allocation2 + $0x8] sm:$0xff]
    %v177 = vld [vmem:[#allocation2 + $0x10] sm:$0xff]
    %v178 = vld [vmem:[#allocation2 + $0x18] sm:$0xff]
    %v179 = vld [vmem:[#allocation2 + $0x20] sm:$0xff]
    %v180 = vld [vmem:[#allocation2 + $0x28] sm:$0xff]
    %v181 = vld [vmem:[%s4] sm:$0x1]
    %v183 = vlaneseq
    %v184 = vshrl.u32 %v183, 7
    %v185 = vsub.s32 0, %v184
    %v186 = vrot.slane %v181, %v185
    %vm188 = vcmask 392192
    %v190 = vsel %vm188, %v173, 0
    %192 = vmatprep.subr.mxu0 0.0
    %193 = vmatpush1.msra.mxu0 0.0
    %194 = vmatprep.subr.mxu0 0.0
    %195 = vmatpush1.msra.mxu0 0.0
    %196 = vmatprep.subr.mxu0 0.0
    %197 = vmatpush1.msra.mxu0 0.0
    %198 = vmatprep.subr.mxu0 0.0
    %199 = vmatpush1.msra.mxu0 0.0
    %200 = vmatprep.subr.mxu0 0.0
    %201 = vmatpush1.msra.mxu0 0.0
    %202 = vmatprep.subr.mxu0 0.0
    %203 = vmatpush1.msra.mxu0 0.0
    %204 = vmatprep.subr.mxu0 0.0
    %205 = vmatpush1.msra.mxu0 0.0
    %206 = vmatprep.subr.mxu0 0.0
    %207 = vmatpush1.msra.mxu0 0.0
    %208 = vmatprep.subr.mxu0 0.0
    %209 = vmatpush1.msra.mxu0 0.0
    %210 = vmatprep.subr.mxu0 0.0
    %211 = vmatpush1.msra.mxu0 0.0
    %212 = vmatprep.subr.mxu0 0.0
    %213 = vmatpush1.msra.mxu0 %v180
    %214 = vmatprep.subr.mxu0 0.0
    %215 = vmatpush1.msra.mxu0 %v179
    %216 = vmatprep.subr.mxu0 0.0
    %217 = vmatpush1.msra.mxu0 %v178
    %218 = vmatprep.subr.mxu0 0.0
    %219 = vmatpush1.msra.mxu0 %v177
    %220 = vmatprep.subr.mxu0 0.0
    %221 = vmatpush1.msra.mxu0 %v176
    %222 = vmatprep.subr.mxu0 0.0
    %223 = vmatpush1.msra.mxu0 %v175
    %224 = vmatprep.subr.mxu0 0.0
    %225 = vmatpush2.msra.mxu0 0.0
    %226 = vmatprep.subr.mxu0 0.0
    %227 = vmatpush2.msra.mxu0 0.0
    %228 = vmatprep.subr.mxu0 0.0
    %229 = vmatpush2.msra.mxu0 0.0
    %230 = vmatprep.subr.mxu0 0.0
    %231 = vmatpush2.msra.mxu0 0.0
    %232 = vmatprep.subr.mxu0 0.0
    %233 = vmatpush2.msra.mxu0 0.0
    %234 = vmatprep.subr.mxu0 0.0
    %235 = vmatpush2.msra.mxu0 0.0
    %236 = vmatprep.subr.mxu0 0.0
    %237 = vmatpush2.msra.mxu0 0.0
    %238 = vmatprep.subr.mxu0 0.0
    %239 = vmatpush2.msra.mxu0 0.0
    %240 = vmatprep.subr.mxu0 0.0
    %241 = vmatpush2.msra.mxu0 0.0
    %242 = vmatprep.subr.mxu0 0.0
    %243 = vmatpush2.msra.mxu0 0.0
    %244 = vmatprep.subr.mxu0 0.0
    %245 = vmatpush2.msra.mxu0 0.0
    %246 = vmatprep.subr.mxu0 0.0
    %247 = vmatpush2.msra.mxu0 0.0
    %248 = vmatprep.subr.mxu0 0.0
    %249 = vmatpush2.msra.mxu0 0.0
    %250 = vmatprep.subr.mxu0 0.0
    %251 = vmatpush2.msra.mxu0 0.0
    %252 = vmatprep.subr.mxu0 0.0
    %253 = vmatpush2.msra.mxu0 0.0
    %254 = vmatprep.subr.mxu0 0.0
    %255 = vmatpush2.msra.mxu0 0.0
    %256 = vmatprep.mubr.f32.mxu0 0.0
    %257 = vmatmul.mubr.f32.gmra.mxu0 %v190
    %v258 = vpop.f32.mrf.mxu0
    %v259 = vadd.f32 %v186, %v258
    %v260 = vpop.f32.mrf.mxu0
    %261 = vdwg.mxu0
    %v262 = vld [vmem:[%s3] sm:$0xff]
    %v263 = vld [vmem:[%s3 + $0x8] sm:$0xff]
    %v264 = vld [vmem:[%s3 + $0x10] sm:$0xff]
    %v265 = vld [vmem:[%s3 + $0x18] sm:$0xff]
    %vm266 = vcmask 261120
    %v268 = vsel %vm266, %v174, 0
    %270 = vmatprep.subr.mxu0 0.0
    %271 = vmatpush1.msra.mxu0 0.0
    %272 = vmatprep.subr.mxu0 0.0
    %273 = vmatpush1.msra.mxu0 0.0
    %274 = vmatprep.subr.mxu0 0.0
    %275 = vmatpush1.msra.mxu0 0.0
    %276 = vmatprep.subr.mxu0 0.0
    %277 = vmatpush1.msra.mxu0 0.0
    %278 = vmatprep.subr.mxu0 0.0
    %279 = vmatpush1.msra.mxu0 0.0
    %280 = vmatprep.subr.mxu0 0.0
    %281 = vmatpush1.msra.mxu0 0.0
    %282 = vmatprep.subr.mxu0 0.0
    %283 = vmatpush1.msra.mxu0 0.0
    %284 = vmatprep.subr.mxu0 0.0
    %285 = vmatpush1.msra.mxu0 0.0
    %286 = vmatprep.subr.mxu0 0.0
    %287 = vmatpush1.msra.mxu0 0.0
    %288 = vmatprep.subr.mxu0 0.0
    %289 = vmatpush1.msra.mxu0 0.0
    %290 = vmatprep.subr.mxu0 0.0
    %291 = vmatpush1.msra.mxu0 0.0
    %292 = vmatprep.subr.mxu0 0.0
    %293 = vmatpush1.msra.mxu0 0.0
    %294 = vmatprep.subr.mxu0 0.0
    %295 = vmatpush1.msra.mxu0 %v265
    %296 = vmatprep.subr.mxu0 0.0
    %297 = vmatpush1.msra.mxu0 %v264
    %298 = vmatprep.subr.mxu0 0.0
    %299 = vmatpush1.msra.mxu0 %v263
    %300 = vmatprep.subr.mxu0 0.0
    %301 = vmatpush1.msra.mxu0 %v262
    %302 = vmatprep.subr.mxu0 0.0
    %303 = vmatpush2.msra.mxu0 0.0
    %304 = vmatprep.subr.mxu0 0.0
    %305 = vmatpush2.msra.mxu0 0.0
    %306 = vmatprep.subr.mxu0 0.0
    %307 = vmatpush2.msra.mxu0 0.0
    %308 = vmatprep.subr.mxu0 0.0
    %309 = vmatpush2.msra.mxu0 0.0
    %310 = vmatprep.subr.mxu0 0.0
    %311 = vmatpush2.msra.mxu0 0.0
    %312 = vmatprep.subr.mxu0 0.0
    %313 = vmatpush2.msra.mxu0 0.0
    %314 = vmatprep.subr.mxu0 0.0
    %315 = vmatpush2.msra.mxu0 0.0
    %316 = vmatprep.subr.mxu0 0.0
    %317 = vmatpush2.msra.mxu0 0.0
    %318 = vmatprep.subr.mxu0 0.0
    %319 = vmatpush2.msra.mxu0 0.0
    %320 = vmatprep.subr.mxu0 0.0
    %321 = vmatpush2.msra.mxu0 0.0
    %322 = vmatprep.subr.mxu0 0.0
    %323 = vmatpush2.msra.mxu0 0.0
    %324 = vmatprep.subr.mxu0 0.0
    %325 = vmatpush2.msra.mxu0 0.0
    %326 = vmatprep.subr.mxu0 0.0
    %327 = vmatpush2.msra.mxu0 0.0
    %328 = vmatprep.subr.mxu0 0.0
    %329 = vmatpush2.msra.mxu0 0.0
    %330 = vmatprep.subr.mxu0 0.0
    %331 = vmatpush2.msra.mxu0 0.0
    %332 = vmatprep.subr.mxu0 0.0
    %333 = vmatpush2.msra.mxu0 0.0
    %334 = vmatprep.mubr.f32.mxu0 0.0
    %335 = vmatmul.mubr.f32.gmra.mxu0 %v268
    %v336 = vpop.f32.mrf.mxu0
    %v337 = vadd.f32 0.0, %v336
    %v338 = vpop.f32.mrf.mxu0
    %339 = vdwg.mxu0
    %v340 = vadd.f32 %v259, %v337
    %v341 = vxor.u32 %v340, 2147483648
    %v342 = vmul.f32 %v341, 1.442695
    %v343 = vpow.pop %v342
    %v344 = vadd.f32 %v343, 1.0
    %v345 = vrcp.pop %v344
    %v346 = vmul.f32 1.0, %v345
    %v347 = vld [vmem:[#allocation4] sm:$0x1]
    %v349 = vlaneseq
    %v350 = vshrl.u32 %v349, 7
    %v351 = vsub.s32 0, %v350
    %v352 = vrot.slane %v347, %v351
    %353 = vrot.lane.b32.xlu0 %v352, 64
    %v354 = vpop.permute.xlu0 %353
    %v356 = vadd.f32 %v337, %v354
    %358 = vrot.lane.b32.xlu0 %v356, 64
    %v359 = vpop.permute.xlu0 %358
    %v361 = vmul.f32 %v346, %v359
    %363 = vrot.lane.b32.xlu0 %v361, 64
    %v364 = vpop.permute.xlu0 %363
    %v366 = vadd.f32 %v259, %v364
    %v367 = vtanh.pop %v366
    %369 = vrot.lane.b32.xlu0 %v367, 64
    %v370 = vpop.permute.xlu0 %369
    %v372 = vsub.f32 %v174, %v370
    %374 = vrot.lane.b32.xlu0 %v372, 32
    %v375 = vpop.permute.xlu0 %374
    %v377 = vmul.f32 %v346, %v375
    %379 = vrot.lane.b32.xlu0 %v377, 32
    %v380 = vpop.permute.xlu0 %379
    %v382 = vadd.f32 %v367, %v380
    %384 = vrot.lane.b32.xlu0 %v382, 64
    %v385 = vpop.permute.xlu0 %384
    %387 = vst.msk [vmem:[%s14] sm:$0xff] %vm266, %v385
    %s388 = scalar_lea.vmem %s1, 8
    %v389 = vld [vmem:[%s388] sm:$0xff]
    %v390 = vld [vmem:[#allocation6] sm:$0xff]
    %v391 = vld [vmem:[#allocation6 + $0x8] sm:$0xff]
    %v392 = vld [vmem:[#allocation6 + $0x10] sm:$0xff]
    %v393 = vld [vmem:[#allocation6 + $0x18] sm:$0xff]
    %v394 = vld [vmem:[#allocation9] sm:$0x1]
    %v396 = vlaneseq
    %v397 = vshrl.u32 %v396, 7
    %v398 = vsub.s32 0, %v397
    %v399 = vrot.slane %v394, %v398
    %v401 = vsel %vm266, %v385, 0
    %403 = vmatprep.subr.mxu0 0.0
    %404 = vmatpush1.msra.mxu0 0.0
    %405 = vmatprep.subr.mxu0 0.0
    %406 = vmatpush1.msra.mxu0 0.0
    %407 = vmatprep.subr.mxu0 0.0
    %408 = vmatpush1.msra.mxu0 0.0
    %409 = vmatprep.subr.mxu0 0.0
    %410 = vmatpush1.msra.mxu0 0.0
    %411 = vmatprep.subr.mxu0 0.0
    %412 = vmatpush1.msra.mxu0 0.0
    %413 = vmatprep.subr.mxu0 0.0
    %414 = vmatpush1.msra.mxu0 0.0
    %415 = vmatprep.subr.mxu0 0.0
    %416 = vmatpush1.msra.mxu0 0.0
    %417 = vmatprep.subr.mxu0 0.0
    %418 = vmatpush1.msra.mxu0 0.0
    %419 = vmatprep.subr.mxu0 0.0
    %420 = vmatpush1.msra.mxu0 0.0
    %421 = vmatprep.subr.mxu0 0.0
    %422 = vmatpush1.msra.mxu0 0.0
    %423 = vmatprep.subr.mxu0 0.0
    %424 = vmatpush1.msra.mxu0 0.0
    %425 = vmatprep.subr.mxu0 0.0
    %426 = vmatpush1.msra.mxu0 0.0
    %427 = vmatprep.subr.mxu0 0.0
    %428 = vmatpush1.msra.mxu0 %v393
    %429 = vmatprep.subr.mxu0 0.0
    %430 = vmatpush1.msra.mxu0 %v392
    %431 = vmatprep.subr.mxu0 0.0
    %432 = vmatpush1.msra.mxu0 %v391
    %433 = vmatprep.subr.mxu0 0.0
    %434 = vmatpush1.msra.mxu0 %v390
    %435 = vmatprep.subr.mxu0 0.0
    %436 = vmatpush2.msra.mxu0 0.0
    %437 = vmatprep.subr.mxu0 0.0
    %438 = vmatpush2.msra.mxu0 0.0
    %439 = vmatprep.subr.mxu0 0.0
    %440 = vmatpush2.msra.mxu0 0.0
    %441 = vmatprep.subr.mxu0 0.0
    %442 = vmatpush2.msra.mxu0 0.0
    %443 = vmatprep.subr.mxu0 0.0
    %444 = vmatpush2.msra.mxu0 0.0
    %445 = vmatprep.subr.mxu0 0.0
    %446 = vmatpush2.msra.mxu0 0.0
    %447 = vmatprep.subr.mxu0 0.0
    %448 = vmatpush2.msra.mxu0 0.0
    %449 = vmatprep.subr.mxu0 0.0
    %450 = vmatpush2.msra.mxu0 0.0
    %451 = vmatprep.subr.mxu0 0.0
    %452 = vmatpush2.msra.mxu0 0.0
    %453 = vmatprep.subr.mxu0 0.0
    %454 = vmatpush2.msra.mxu0 0.0
    %455 = vmatprep.subr.mxu0 0.0
    %456 = vmatpush2.msra.mxu0 0.0
    %457 = vmatprep.subr.mxu0 0.0
    %458 = vmatpush2.msra.mxu0 0.0
    %459 = vmatprep.subr.mxu0 0.0
    %460 = vmatpush2.msra.mxu0 0.0
    %461 = vmatprep.subr.mxu0 0.0
    %462 = vmatpush2.msra.mxu0 0.0
    %463 = vmatprep.subr.mxu0 0.0
    %464 = vmatpush2.msra.mxu0 0.0
    %465 = vmatprep.subr.mxu0 0.0
    %466 = vmatpush2.msra.mxu0 0.0
    %467 = vmatprep.mubr.f32.mxu0 0.0
    %468 = vmatmul.mubr.f32.gmra.mxu0 %v401
    %v469 = vpop.f32.mrf.mxu0
    %v470 = vadd.f32 %v399, %v469
    %v471 = vpop.f32.mrf.mxu0
    %472 = vdwg.mxu0
    %v473 = vld [vmem:[#allocation7] sm:$0xff]
    %v474 = vld [vmem:[#allocation7 + $0x8] sm:$0xff]
    %v475 = vld [vmem:[#allocation7 + $0x10] sm:$0xff]
    %v476 = vld [vmem:[#allocation7 + $0x18] sm:$0xff]
    %v478 = vsel %vm266, %v389, 0
    %480 = vmatprep.subr.mxu0 0.0
    %481 = vmatpush1.msra.mxu0 0.0
    %482 = vmatprep.subr.mxu0 0.0
    %483 = vmatpush1.msra.mxu0 0.0
    %484 = vmatprep.subr.mxu0 0.0
    %485 = vmatpush1.msra.mxu0 0.0
    %486 = vmatprep.subr.mxu0 0.0
    %487 = vmatpush1.msra.mxu0 0.0
    %488 = vmatprep.subr.mxu0 0.0
    %489 = vmatpush1.msra.mxu0 0.0
    %490 = vmatprep.subr.mxu0 0.0
    %491 = vmatpush1.msra.mxu0 0.0
    %492 = vmatprep.subr.mxu0 0.0
    %493 = vmatpush1.msra.mxu0 0.0
    %494 = vmatprep.subr.mxu0 0.0
    %495 = vmatpush1.msra.mxu0 0.0
    %496 = vmatprep.subr.mxu0 0.0
    %497 = vmatpush1.msra.mxu0 0.0
    %498 = vmatprep.subr.mxu0 0.0
    %499 = vmatpush1.msra.mxu0 0.0
    %500 = vmatprep.subr.mxu0 0.0
    %501 = vmatpush1.msra.mxu0 0.0
    %502 = vmatprep.subr.mxu0 0.0
    %503 = vmatpush1.msra.mxu0 0.0
    %504 = vmatprep.subr.mxu0 0.0
    %505 = vmatpush1.msra.mxu0 %v476
    %506 = vmatprep.subr.mxu0 0.0
    %507 = vmatpush1.msra.mxu0 %v475
    %508 = vmatprep.subr.mxu0 0.0
    %509 = vmatpush1.msra.mxu0 %v474
    %510 = vmatprep.subr.mxu0 0.0
    %511 = vmatpush1.msra.mxu0 %v473
    %512 = vmatprep.subr.mxu0 0.0
    %513 = vmatpush2.msra.mxu0 0.0
    %514 = vmatprep.subr.mxu0 0.0
    %515 = vmatpush2.msra.mxu0 0.0
    %516 = vmatprep.subr.mxu0 0.0
    %517 = vmatpush2.msra.mxu0 0.0
    %518 = vmatprep.subr.mxu0 0.0
    %519 = vmatpush2.msra.mxu0 0.0
    %520 = vmatprep.subr.mxu0 0.0
    %521 = vmatpush2.msra.mxu0 0.0
    %522 = vmatprep.subr.mxu0 0.0
    %523 = vmatpush2.msra.mxu0 0.0
    %524 = vmatprep.subr.mxu0 0.0
    %525 = vmatpush2.msra.mxu0 0.0
    %526 = vmatprep.subr.mxu0 0.0
    %527 = vmatpush2.msra.mxu0 0.0
    %528 = vmatprep.subr.mxu0 0.0
    %529 = vmatpush2.msra.mxu0 0.0
    %530 = vmatprep.subr.mxu0 0.0
    %531 = vmatpush2.msra.mxu0 0.0
    %532 = vmatprep.subr.mxu0 0.0
    %533 = vmatpush2.msra.mxu0 0.0
    %534 = vmatprep.subr.mxu0 0.0
    %535 = vmatpush2.msra.mxu0 0.0
    %536 = vmatprep.subr.mxu0 0.0
    %537 = vmatpush2.msra.mxu0 0.0
    %538 = vmatprep.subr.mxu0 0.0
    %539 = vmatpush2.msra.mxu0 0.0
    %540 = vmatprep.subr.mxu0 0.0
    %541 = vmatpush2.msra.mxu0 0.0
    %542 = vmatprep.subr.mxu0 0.0
    %543 = vmatpush2.msra.mxu0 0.0
    %544 = vmatprep.mubr.f32.mxu0 0.0
    %545 = vmatmul.mubr.f32.gmra.mxu0 %v478
    %v546 = vpop.f32.mrf.mxu0
    %v547 = vadd.f32 0.0, %v546
    %v548 = vpop.f32.mrf.mxu0
    %549 = vdwg.mxu0
    %v550 = vadd.f32 %v470, %v547
    %v551 = vxor.u32 %v550, 2147483648
    %v552 = vmul.f32 %v551, 1.442695
    %v553 = vpow.pop %v552
    %v554 = vadd.f32 %v553, 1.0
    %v555 = vrcp.pop %v554
    %v556 = vmul.f32 1.0, %v555
    %v557 = vld [vmem:[#allocation10] sm:$0x1]
    %v559 = vlaneseq
    %v560 = vshrl.u32 %v559, 7
    %v561 = vsub.s32 0, %v560
    %v562 = vrot.slane %v557, %v561
    %563 = vrot.lane.b32.xlu0 %v562, 64
    %v564 = vpop.permute.xlu0 %563
    %v566 = vadd.f32 %v547, %v564
    %568 = vrot.lane.b32.xlu0 %v566, 64
    %v569 = vpop.permute.xlu0 %568
    %v571 = vmul.f32 %v556, %v569
    %573 = vrot.lane.b32.xlu0 %v571, 64
    %v574 = vpop.permute.xlu0 %573
    %v576 = vadd.f32 %v470, %v574
    %v577 = vtanh.pop %v576
    %579 = vrot.lane.b32.xlu0 %v577, 64
    %v580 = vpop.permute.xlu0 %579
    %v582 = vsub.f32 %v389, %v580
    %584 = vrot.lane.b32.xlu0 %v582, 32
    %v585 = vpop.permute.xlu0 %584
    %v587 = vmul.f32 %v556, %v585
    %589 = vrot.lane.b32.xlu0 %v587, 32
    %v590 = vpop.permute.xlu0 %589
    %v592 = vadd.f32 %v577, %v590
    %594 = vrot.lane.b32.xlu0 %v592, 64
    %v595 = vpop.permute.xlu0 %594
    %s597 = scalar_lea.vmem %s14, 8
    %598 = vst.msk [vmem:[%s597] sm:$0xff] %vm266, %v595
    %s599 = scalar_lea.vmem %s1, 16
    %v600 = vld [vmem:[%s599] sm:$0xff]
    %v601 = vld [vmem:[#allocation12] sm:$0xff]
    %v602 = vld [vmem:[#allocation12 + $0x8] sm:$0xff]
    %v603 = vld [vmem:[#allocation12 + $0x10] sm:$0xff]
    %v604 = vld [vmem:[#allocation12 + $0x18] sm:$0xff]
    %v605 = vld [vmem:[#allocation15] sm:$0x1]
    %v607 = vlaneseq
    %v608 = vshrl.u32 %v607, 7
    %v609 = vsub.s32 0, %v608
    %v610 = vrot.slane %v605, %v609
    %v612 = vsel %vm266, %v595, 0
    %614 = vmatprep.subr.mxu0 0.0
    %615 = vmatpush1.msra.mxu0 0.0
    %616 = vmatprep.subr.mxu0 0.0
    %617 = vmatpush1.msra.mxu0 0.0
    %618 = vmatprep.subr.mxu0 0.0
    %619 = vmatpush1.msra.mxu0 0.0
    %620 = vmatprep.subr.mxu0 0.0
    %621 = vmatpush1.msra.mxu0 0.0
    %622 = vmatprep.subr.mxu0 0.0
    %623 = vmatpush1.msra.mxu0 0.0
    %624 = vmatprep.subr.mxu0 0.0
    %625 = vmatpush1.msra.mxu0 0.0
    %626 = vmatprep.subr.mxu0 0.0
    %627 = vmatpush1.msra.mxu0 0.0
    %628 = vmatprep.subr.mxu0 0.0
    %629 = vmatpush1.msra.mxu0 0.0
    %630 = vmatprep.subr.mxu0 0.0
    %631 = vmatpush1.msra.mxu0 0.0
    %632 = vmatprep.subr.mxu0 0.0
    %633 = vmatpush1.msra.mxu0 0.0
    %634 = vmatprep.subr.mxu0 0.0
    %635 = vmatpush1.msra.mxu0 0.0
    %636 = vmatprep.subr.mxu0 0.0
    %637 = vmatpush1.msra.mxu0 0.0
    %638 = vmatprep.subr.mxu0 0.0
    %639 = vmatpush1.msra.mxu0 %v604
    %640 = vmatprep.subr.mxu0 0.0
    %641 = vmatpush1.msra.mxu0 %v603
    %642 = vmatprep.subr.mxu0 0.0
    %643 = vmatpush1.msra.mxu0 %v602
    %644 = vmatprep.subr.mxu0 0.0
    %645 = vmatpush1.msra.mxu0 %v601
    %646 = vmatprep.subr.mxu0 0.0
    %647 = vmatpush2.msra.mxu0 0.0
    %648 = vmatprep.subr.mxu0 0.0
    %649 = vmatpush2.msra.mxu0 0.0
    %650 = vmatprep.subr.mxu0 0.0
    %651 = vmatpush2.msra.mxu0 0.0
    %652 = vmatprep.subr.mxu0 0.0
    %653 = vmatpush2.msra.mxu0 0.0
    %654 = vmatprep.subr.mxu0 0.0
    %655 = vmatpush2.msra.mxu0 0.0
    %656 = vmatprep.subr.mxu0 0.0
    %657 = vmatpush2.msra.mxu0 0.0
    %658 = vmatprep.subr.mxu0 0.0
    %659 = vmatpush2.msra.mxu0 0.0
    %660 = vmatprep.subr.mxu0 0.0
    %661 = vmatpush2.msra.mxu0 0.0
    %662 = vmatprep.subr.mxu0 0.0
    %663 = vmatpush2.msra.mxu0 0.0
    %664 = vmatprep.subr.mxu0 0.0
    %665 = vmatpush2.msra.mxu0 0.0
    %666 = vmatprep.subr.mxu0 0.0
    %667 = vmatpush2.msra.mxu0 0.0
    %668 = vmatprep.subr.mxu0 0.0
    %669 = vmatpush2.msra.mxu0 0.0
    %670 = vmatprep.subr.mxu0 0.0
    %671 = vmatpush2.msra.mxu0 0.0
    %672 = vmatprep.subr.mxu0 0.0
    %673 = vmatpush2.msra.mxu0 0.0
    %674 = vmatprep.subr.mxu0 0.0
    %675 = vmatpush2.msra.mxu0 0.0
    %676 = vmatprep.subr.mxu0 0.0
    %677 = vmatpush2.msra.mxu0 0.0
    %678 = vmatprep.mubr.f32.mxu0 0.0
    %679 = vmatmul.mubr.f32.gmra.mxu0 %v612
    %v680 = vpop.f32.mrf.mxu0
    %v681 = vadd.f32 %v610, %v680
    %v682 = vpop.f32.mrf.mxu0
    %683 = vdwg.mxu0
    %v684 = vld [vmem:[#allocation13] sm:$0xff]
    %v685 = vld [vmem:[#allocation13 + $0x8] sm:$0xff]
    %v686 = vld [vmem:[#allocation13 + $0x10] sm:$0xff]
    %v687 = vld [vmem:[#allocation13 + $0x18] sm:$0xff]
    %v689 = vsel %vm266, %v600, 0
    %691 = vmatprep.subr.mxu0 0.0
    %692 = vmatpush1.msra.mxu0 0.0
    %693 = vmatprep.subr.mxu0 0.0
    %694 = vmatpush1.msra.mxu0 0.0
    %695 = vmatprep.subr.mxu0 0.0
    %696 = vmatpush1.msra.mxu0 0.0
    %697 = vmatprep.subr.mxu0 0.0
    %698 = vmatpush1.msra.mxu0 0.0
    %699 = vmatprep.subr.mxu0 0.0
    %700 = vmatpush1.msra.mxu0 0.0
    %701 = vmatprep.subr.mxu0 0.0
    %702 = vmatpush1.msra.mxu0 0.0
    %703 = vmatprep.subr.mxu0 0.0
    %704 = vmatpush1.msra.mxu0 0.0
    %705 = vmatprep.subr.mxu0 0.0
    %706 = vmatpush1.msra.mxu0 0.0
    %707 = vmatprep.subr.mxu0 0.0
    %708 = vmatpush1.msra.mxu0 0.0
    %709 = vmatprep.subr.mxu0 0.0
    %710 = vmatpush1.msra.mxu0 0.0
    %711 = vmatprep.subr.mxu0 0.0
    %712 = vmatpush1.msra.mxu0 0.0
    %713 = vmatprep.subr.mxu0 0.0
    %714 = vmatpush1.msra.mxu0 0.0
    %715 = vmatprep.subr.mxu0 0.0
    %716 = vmatpush1.msra.mxu0 %v687
    %717 = vmatprep.subr.mxu0 0.0
    %718 = vmatpush1.msra.mxu0 %v686
    %719 = vmatprep.subr.mxu0 0.0
    %720 = vmatpush1.msra.mxu0 %v685
    %721 = vmatprep.subr.mxu0 0.0
    %722 = vmatpush1.msra.mxu0 %v684
    %723 = vmatprep.subr.mxu0 0.0
    %724 = vmatpush2.msra.mxu0 0.0
    %725 = vmatprep.subr.mxu0 0.0
    %726 = vmatpush2.msra.mxu0 0.0
    %727 = vmatprep.subr.mxu0 0.0
    %728 = vmatpush2.msra.mxu0 0.0
    %729 = vmatprep.subr.mxu0 0.0
    %730 = vmatpush2.msra.mxu0 0.0
    %731 = vmatprep.subr.mxu0 0.0
    %732 = vmatpush2.msra.mxu0 0.0
    %733 = vmatprep.subr.mxu0 0.0
    %734 = vmatpush2.msra.mxu0 0.0
    %735 = vmatprep.subr.mxu0 0.0
    %736 = vmatpush2.msra.mxu0 0.0
    %737 = vmatprep.subr.mxu0 0.0
    %738 = vmatpush2.msra.mxu0 0.0
    %739 = vmatprep.subr.mxu0 0.0
    %740 = vmatpush2.msra.mxu0 0.0
    %741 = vmatprep.subr.mxu0 0.0
    %742 = vmatpush2.msra.mxu0 0.0
    %743 = vmatprep.subr.mxu0 0.0
    %744 = vmatpush2.msra.mxu0 0.0
    %745 = vmatprep.subr.mxu0 0.0
    %746 = vmatpush2.msra.mxu0 0.0
    %747 = vmatprep.subr.mxu0 0.0
    %748 = vmatpush2.msra.mxu0 0.0
    %749 = vmatprep.subr.mxu0 0.0
    %750 = vmatpush2.msra.mxu0 0.0
    %751 = vmatprep.subr.mxu0 0.0
    %752 = vmatpush2.msra.mxu0 0.0
    %753 = vmatprep.subr.mxu0 0.0
    %754 = vmatpush2.msra.mxu0 0.0
    %755 = vmatprep.mubr.f32.mxu0 0.0
    %756 = vmatmul.mubr.f32.gmra.mxu0 %v689
    %v757 = vpop.f32.mrf.mxu0
    %v758 = vadd.f32 0.0, %v757
    %v759 = vpop.f32.mrf.mxu0
    %760 = vdwg.mxu0
    %v761 = vadd.f32 %v681, %v758
    %v762 = vxor.u32 %v761, 2147483648
    %v763 = vmul.f32 %v762, 1.442695
    %v764 = vpow.pop %v763
    %v765 = vadd.f32 %v764, 1.0
    %v766 = vrcp.pop %v765
    %v767 = vmul.f32 1.0, %v766
    %v768 = vld [vmem:[#allocation16] sm:$0x1]
    %v770 = vlaneseq
    %v771 = vshrl.u32 %v770, 7
    %v772 = vsub.s32 0, %v771
    %v773 = vrot.slane %v768, %v772
    %774 = vrot.lane.b32.xlu0 %v773, 64
    %v775 = vpop.permute.xlu0 %774
    %v777 = vadd.f32 %v758, %v775
    %779 = vrot.lane.b32.xlu0 %v777, 64
    %v780 = vpop.permute.xlu0 %779
    %v782 = vmul.f32 %v767, %v780
    %784 = vrot.lane.b32.xlu0 %v782, 64
    %v785 = vpop.permute.xlu0 %784
    %v787 = vadd.f32 %v681, %v785
    %v788 = vtanh.pop %v787
    %790 = vrot.lane.b32.xlu0 %v788, 64
    %v791 = vpop.permute.xlu0 %790
    %v793 = vsub.f32 %v600, %v791
    %795 = vrot.lane.b32.xlu0 %v793, 32
    %v796 = vpop.permute.xlu0 %795
    %v798 = vmul.f32 %v767, %v796
    %800 = vrot.lane.b32.xlu0 %v798, 32
    %v801 = vpop.permute.xlu0 %800
    %v803 = vadd.f32 %v788, %v801
    %805 = vrot.lane.b32.xlu0 %v803, 64
    %v806 = vpop.permute.xlu0 %805
    %s808 = scalar_lea.vmem %s14, 16
    %809 = vst.msk [vmem:[%s808] sm:$0xff] %vm266, %v806
    // Predicated region
    $region98: #{gru_forward.1} parent=1 // pred_check
      _
    $region99: #{gru_forward.1} parent=1 // pred_check_branch
      %811 = sbr.rel (0) target = $region101
    $region100: #{gru_forward.1} parent=1 // pred_region
      _
    $region101: #{gru_forward.1} parent=1 // pred_fallthru
      _
    // Predicated region
    $region102: #{gru_forward.1} parent=1 // pred_check
      _
    $region103: #{gru_forward.1} parent=1 // pred_check_branch
      %813 = sbr.rel (0) target = $region105
    $region104: #{gru_forward.1} parent=1 // pred_region
      _
    $region105: #{gru_forward.1} parent=1 // pred_fallthru
      _
    %814 = vsyncpa [#allocation3], 1
    %815 = vsyncpa [#allocation5], 1
    %816 = vsyncpa [#allocation8], 1
    %817 = vsyncpa [#allocation11], 1
    %818 = vsyncpa [#allocation14], 1
    %819 = vsyncpa [#allocation17], 1

</llo_original>
